<compile_context>
chip_gen: v5e
topology: v5e:2x2
jax: 0.10.0
libtpu: 0.0.40
codegen_flags: <defaults>
</compile_context>

<pallas_src>
import jax
import jax.numpy as jnp
from jax import lax
from jax.experimental import pallas as pl
from jax.experimental.pallas import tpu as pltpu

_SUB = 8  # batch rows processed per inner compute chunk (one f32 sublane group)


def _make_attention_kernel(nb, rem):
    """Build a kernel for one (bt, T, Hp) batch tile, with bt = nb*_SUB + rem."""

    def kernel(x_ref, w_ref, o_ref):
        # x_ref: (bt, T, Hp) rnn outputs for bt batch rows, native dtype
        # w_ref: (1, Hp)     attention projection weight (f32, lane-dense)
        # o_ref: (bt, Hp)    context vectors for this batch tile
        wv = w_ref[...].astype(x_ref.dtype)  # keep elementwise products in input dtype

        def process(x):
            # x: (rows, T, Hp) in the input dtype; reductions accumulate in f32.
            # scores[b, t] = <x[b, t, :], w>   (bias dropped: softmax shift-invariant)
            scores = jnp.sum(x * wv[None], axis=-1, dtype=jnp.float32)     # (rows, T)
            # Numerically stable softmax over T (lane axis), all f32.
            m = jnp.max(scores, axis=-1, keepdims=True)                    # (rows, 1)
            e = jnp.exp(scores - m)                                        # (rows, T)
            s = jnp.sum(e, axis=-1, keepdims=True)                         # (rows, 1)
            r = pl.reciprocal(s, approx=True)       # EUP slot (otherwise idle)
            r = r * (2.0 - s * r)                    # one Newton step -> ~f32 accuracy
            wts = (e * r).astype(x.dtype)                                  # (rows, T)
            # context[b, :] = sum_t wts[b, t] * x[b, t, :], f32 accumulation.
            return jnp.sum(wts[:, :, None] * x, axis=1, dtype=jnp.float32)  # (rows, Hp)

        if nb > 0:
            # fori_loop (not a Python loop) so each chunk's temps have bounded
            # live ranges; offsets are 8-aligned for clean sublane stores.
            def body(j, carry):
                off = pl.multiple_of(j * _SUB, _SUB)
                ctx = process(x_ref[pl.ds(off, _SUB)])
                o_ref[pl.ds(off, _SUB), :] = ctx.astype(o_ref.dtype)
                return carry

            lax.fori_loop(0, nb, body, 0)

        if rem > 0:
            base = nb * _SUB                      # static tail (e.g. tiny batches)
            ctx = process(x_ref[base:base + rem])
            o_ref[base:base + rem, :] = ctx.astype(o_ref.dtype)

    return kernel


def _device_vmem_plan():
    """Return (tile_budget_bytes, vmem_limit_bytes, min_grid_steps) per TPU gen."""
    kind = ""
    try:
        kind = jax.devices()[0].device_kind.lower()
    except Exception:
        pass
    if any(t in kind for t in ("v2", "v3")):
        # Legacy parts with tiny VMEM: stay small.
        return 8 << 20, 14 << 20, 1
    if any(t in kind for t in ("v4", "v5", "v6")):
        # 128 MiB physical VMEM: large tiles amortize the ~0.35us/step overhead
        # and push DMAs into the high-efficiency regime.
        return 56 << 20, 100 << 20, 1
    # v7x (64 MiB VMEM, 2 TensorCores) or unknown: conservative tile budget and
    # keep >= 2 grid steps so the "parallel" axis feeds both cores.
    return 14 << 20, 40 << 20, 2


def _pick_batch_tile(B, T, Hp, itemsize, budget_bytes, min_steps):
    """How many batch rows to process per grid step."""
    # Per batch row: double-buffered input tile + double-buffered output row.
    per_b = 2 * T * Hp * itemsize + 2 * Hp * itemsize
    # Fixed in-kernel working set: one (SUB, T, Hp) chunk product in the input
    # dtype plus its f32 copy for the accumulating reduction (peak, not sum).
    fixed = _SUB * T * Hp * (itemsize + 8)
    avail = max(budget_bytes - fixed, per_b)
    bt = max(1, avail // per_b)
    if min_steps > 1:
        cap = -(-B // min_steps)                                  # cdiv
        cap = max(_SUB, ((cap + _SUB - 1) // _SUB) * _SUB)
        bt = min(bt, cap)
    if bt >= B:
        return B
    # Partial-batch tiles: output block's second-to-last dim must be 8-aligned.
    return min(max(_SUB, (bt // _SUB) * _SUB), B)


def attention_pool(rnn_output, weight, bias=None):
    """Pallas forward of the Attention module.

    rnn_output: (B, T, H) float array; weight: (1, H); bias ignored because
    softmax over T is invariant to adding the same scalar to every score.
    """
    del bias  # mathematically redundant for the forward output
    B, T, H = rnn_output.shape
    w = weight.reshape(1, H).astype(jnp.float32)

    # Lane-dense layout: pad H up to a multiple of 128. Zero padding is exact:
    # padded columns add 0 to every score and produce 0 context (sliced off).
    Hp = ((H + 127) // 128) * 128
    if Hp != H:
        x = jnp.pad(rnn_output, ((0, 0), (0, 0), (0, Hp - H)))
        w = jnp.pad(w, ((0, 0), (0, Hp - H)))
    else:
        x = rnn_output

    budget, vmem_limit, min_steps = _device_vmem_plan()
    bt = _pick_batch_tile(B, T, Hp, x.dtype.itemsize, budget, min_steps)
    grid = (pl.cdiv(B, bt),)
    nb, rem = divmod(bt, _SUB)

    out = pl.pallas_call(
        _make_attention_kernel(nb, rem),
        out_shape=jax.ShapeDtypeStruct((B, Hp), rnn_output.dtype),
        grid_spec=pltpu.PrefetchScalarGridSpec(
            num_scalar_prefetch=0,
            grid=grid,
            in_specs=[
                # Large batch-tile of the RNN output (native dtype, big DMA).
                pl.BlockSpec((bt, T, Hp), lambda i: (i, 0, 0)),
                # Shared projection weight, lane-dense.
                pl.BlockSpec((1, Hp), lambda i: (0, 0)),
            ],
            out_specs=pl.BlockSpec((bt, Hp), lambda i: (i, 0)),
        ),
        compiler_params=pltpu.CompilerParams(
            dimension_semantics=("parallel",),
            vmem_limit_bytes=vmem_limit,
        ),
    )(x, w)
    return out[:, :H] if Hp != H else out


def attention_pool_ref(rnn_output, weight, bias):
    # Pure-JAX reference mirroring the PyTorch forward exactly (bias included).
    scores = jnp.einsum("bth,oh->bto", rnn_output, weight) + bias  # (B, T, 1)
    w = jax.nn.softmax(scores[..., 0], axis=1)                     # (B, T)
    return jnp.sum(w[..., None] * rnn_output, axis=1)              # (B, H)


if __name__ == "__main__":
    key = jax.random.PRNGKey(0)
    k_x, k_w, k_b = jax.random.split(key, 3)

    B, T, H = 2, 8, 32  # batch, seq, hidden_dim

    rnn_output = jax.random.normal(k_x, (B, T, H), dtype=jnp.float32)
    # nn.Linear(hidden_dim, 1): weight (1, H), bias (1,), U(-1/sqrt(H), 1/sqrt(H))
    bound = 1.0 / jnp.sqrt(jnp.float32(H))
    weight = jax.random.uniform(k_w, (1, H), jnp.float32, -bound, bound)
    bias = jax.random.uniform(k_b, (1,), jnp.float32, -bound, bound)

    out = attention_pool(rnn_output, weight, bias)
    out = jax.block_until_ready(out)

    ref = attention_pool_ref(rnn_output, weight, bias)
    assert out.shape == (B, H), out.shape
    max_err = jnp.max(jnp.abs(out - ref))
    assert jnp.allclose(out, ref, atol=1e-4, rtol=1e-4), max_err

    print("KERNEL_OK")
</pallas_src>

<mosaic_0001>
module attributes {stable_mosaic.version = 11 : i64} {
  func.func @kernel(%arg0: i32, %arg1: memref<2x8x128xf32, #tpu.memory_space<vmem>>, %arg2: memref<1x128xf32, #tpu.memory_space<vmem>>, %arg3: memref<2x128xf32, #tpu.memory_space<vmem>>) attributes {dimension_semantics = [#tpu.dimension_semantics<parallel>], iteration_bounds = array<i64: 1>, scalar_prefetch = 0 : i64, scratch_operands = 0 : i64, tpu.core_type = #tpu.core_type<tc>, window_params = [{transform_indices = @transform_0, window_bounds = array<i64: 2, 8, 128>}, {pipeline_mode = #tpu.pipeline_mode<synchronous>, transform_indices = @transform_1, window_bounds = array<i64: 1, 128>}, {transform_indices = @transform_2, window_bounds = array<i64: 2, 128>}]} {
    %c0 = arith.constant 0 : index
    %c0_0 = arith.constant 0 : index
    %0 = vector.load %arg2[%c0, %c0_0] : memref<1x128xf32, #tpu.memory_space<vmem>>, vector<1x128xf32>
    %c0_1 = arith.constant 0 : index
    %c0_2 = arith.constant 0 : index
    %c0_3 = arith.constant 0 : index
    %1 = vector.load %arg1[%c0_1, %c0_2, %c0_3] : memref<2x8x128xf32, #tpu.memory_space<vmem>>, vector<2x8x128xf32>
    %2 = vector.shape_cast %0 : vector<1x128xf32> to vector<1x1x128xf32>
    %3 = vector.broadcast %2 : vector<1x1x128xf32> to vector<2x8x128xf32>
    %4 = arith.mulf %1, %3 : vector<2x8x128xf32>
    %cst = arith.constant dense<0.000000e+00> : vector<2x8xf32>
    %5 = vector.multi_reduction <add>, %4, %cst [2] : vector<2x8x128xf32> to vector<2x8xf32>
    %cst_4 = arith.constant dense<0xFF800000> : vector<2xf32>
    %6 = vector.multi_reduction <maximumf>, %5, %cst_4 [1] : vector<2x8xf32> to vector<2xf32>
    %7 = vector.shape_cast %6 : vector<2xf32> to vector<2x1xf32>
    %8 = vector.broadcast %7 : vector<2x1xf32> to vector<2x8xf32>
    %9 = arith.subf %5, %8 : vector<2x8xf32>
    %10 = math.exp %9 : vector<2x8xf32>
    %cst_5 = arith.constant dense<0.000000e+00> : vector<2xf32>
    %11 = vector.multi_reduction <add>, %10, %cst_5 [1] : vector<2x8xf32> to vector<2xf32>
    %12 = vector.shape_cast %11 : vector<2xf32> to vector<2x1xf32>
    %13 = tpu.reciprocal %12 {approx = true} : vector<2x1xf32> -> vector<2x1xf32>
    %14 = arith.mulf %12, %13 : vector<2x1xf32>
    %cst_6 = arith.constant 2.000000e+00 : f32
    %15 = vector.broadcast %cst_6 : f32 to vector<2x1xf32>
    %16 = arith.subf %15, %14 : vector<2x1xf32>
    %17 = arith.mulf %13, %16 : vector<2x1xf32>
    %18 = vector.broadcast %17 : vector<2x1xf32> to vector<2x8xf32>
    %19 = arith.mulf %10, %18 : vector<2x8xf32>
    %20 = vector.shape_cast %19 : vector<2x8xf32> to vector<2x8x1xf32>
    %21 = vector.broadcast %20 : vector<2x8x1xf32> to vector<2x8x128xf32>
    %22 = arith.mulf %21, %1 : vector<2x8x128xf32>
    %cst_7 = arith.constant dense<0.000000e+00> : vector<2x128xf32>
    %23 = vector.multi_reduction <add>, %22, %cst_7 [1] : vector<2x8x128xf32> to vector<2x128xf32>
    %c0_8 = arith.constant 0 : index
    %c0_9 = arith.constant 0 : index
    %24 = vector.load %arg3[%c0_8, %c0_9] : memref<2x128xf32, #tpu.memory_space<vmem>>, vector<2x128xf32>
    tpu.vector_store %arg3[%c0_8, %c0_9], %23 {strides = array<i32>} : memref<2x128xf32, #tpu.memory_space<vmem>>, vector<2x128xf32>,
    return
  }
  func.func @transform_0(%arg0: i32) -> (i32, i32, i32) {
    %c0_i32 = arith.constant 0 : i32
    %c0_i32_0 = arith.constant 0 : i32
    %c0_i32_1 = arith.constant 0 : i32
    return %arg0, %c0_i32, %c0_i32_0 : i32, i32, i32
  }
  func.func @transform_1(%arg0: i32) -> (i32, i32) {
    %c0_i32 = arith.constant 0 : i32
    %c0_i32_0 = arith.constant 0 : i32
    %c0_i32_1 = arith.constant 0 : i32
    return %c0_i32, %c0_i32_0 : i32, i32
  }
  func.func @transform_2(%arg0: i32) -> (i32, i32) {
    %c0_i32 = arith.constant 0 : i32
    %c0_i32_0 = arith.constant 0 : i32
    return %arg0, %c0_i32 : i32, i32
  }
}

</mosaic_0001>

<llo_original>
// kernel: tpu_custom_call.1
$region0: #{tpu_custom_call.1}
  #allocation0 [shape = 'u32[]', space=smem, size = 0x4, offset = 0x4, fixed_abs, tag = 'smem constant byte address 0x4 - core index']
  #allocation1 [shape = 'u32[72,128]{1,0:T(1,128)}', space=vmem, size = 0x9000, scoped, tag = 'internal scratch']
  %s0 = inlined_call_operand.hbm [shape: f32[2,8,128], index: 0, kind: input, shape index: {}]
  %s1 = inlined_call_operand.hbm [shape: f32[1,128], index: 1, kind: input, shape index: {}]
  %s2 = inlined_call_operand.hbm [shape: f32[2,128], index: 2, kind: output, shape index: {}]
  %s3 = sld [smem:[#allocation0]]
  $region26: #{tpu_custom_call.1} parent=0
    _
  %s5 = ssub.s32 1, %s3
  %s6 = scalar_select 0, %s5, %s3
  $region1: #{tpu_custom_call.1} parent=0
    #allocation2 [shape = 'u8[8192]{0}', space=vmem, size = 0x2000, scoped, tag = 'input window, operand 0, single buffered']
    #allocation3 [shape = 's32[1]{0}', space=sflag, size = 0x4, scoped, tag = 'scoped memory for tpu_custom_call.1']
    #allocation4 [shape = 's32[1]{0}', space=sflag, size = 0x4, scoped, tag = 'scoped memory for tpu_custom_call.1']
    #allocation5 [shape = 'u8[512]{0}', space=vmem, size = 0x400, scoped, tag = 'input window, operand 1, single buffered']
    #allocation6 [shape = 's32[1]{0}', space=sflag, size = 0x4, scoped, tag = 'scoped memory for tpu_custom_call.1']
    #allocation7 [shape = 'u8[1024]{0}', space=vmem, size = 0x400, scoped, tag = 'output window, operand 0, single buffered']
    %7 = vsyncpa [#allocation3], 0
    %8 = vsyncpa [#allocation6], 0
    %9 = vsyncpa [#allocation4], 0
    // Predicated region
    $region2: #{tpu_custom_call.1} parent=1 // pred_check
      _
    $region3: #{tpu_custom_call.1} parent=1 // pred_check_branch
      %11 = sbr.rel (0) target = $region5
    $region4: #{tpu_custom_call.1} parent=1 // pred_region
      %13 = vsyncadd [#allocation3], 0
      %s14 = sshll.u32 %s0, 4
      %s15 = int_to_ptr.hbm [resolvable:$true] %s14
      %s16 = sshll.u32 [#allocation2], 4
      %s17 = int_to_ptr.vmem [resolvable:$true] %s16
      %22 = dma.hbm_to_vmem [thread:$0]  %s15, 256, %s17, [#allocation3], 128, 128, 8
    $region5: #{tpu_custom_call.1} parent=1 // pred_fallthru
      _
    // Predicated region
    $region6: #{tpu_custom_call.1} parent=1 // pred_check
      _
    $region7: #{tpu_custom_call.1} parent=1 // pred_check_branch
      %24 = sbr.rel (0) target = $region9
    $region8: #{tpu_custom_call.1} parent=1 // pred_region
      %26 = vsyncadd [#allocation6], 0
      %s28 = sshll.u32 %s1, 4
      %s29 = int_to_ptr.hbm [resolvable:$true] %s28
      %s30 = sshll.u32 [#allocation5], 4
      %s31 = int_to_ptr.vmem [resolvable:$true] %s30
      %33 = dma.hbm_to_vmem [thread:$0]  %s29, 16, %s31, [#allocation6]
    $region9: #{tpu_custom_call.1} parent=1 // pred_fallthru
      _
    // Predicated region
    $region10: #{tpu_custom_call.1} parent=1 // pred_check
      _
    $region11: #{tpu_custom_call.1} parent=1 // pred_check_branch
      %35 = sbr.rel (0) target = $region13
    $region12: #{tpu_custom_call.1} parent=1 // pred_region
      %37 = dma.done [#allocation3], 256
    $region13: #{tpu_custom_call.1} parent=1 // pred_fallthru
      _
    // Predicated region
    $region14: #{tpu_custom_call.1} parent=1 // pred_check
      _
    $region15: #{tpu_custom_call.1} parent=1 // pred_check_branch
      %39 = sbr.rel (0) target = $region17
    $region16: #{tpu_custom_call.1} parent=1 // pred_region
      %41 = dma.done [#allocation6], 16
    $region17: #{tpu_custom_call.1} parent=1 // pred_fallthru
      _
    %v42 = vld [vmem:[#allocation5] sm:$0x1]
    %v43 = vld [vmem:[#allocation2] sm:$0xff]
    %v44 = vld [vmem:[#allocation2 + $0x8] sm:$0xff]
    %v46 = vperm.slane %v42, 0
    %v48 = vmul.f32 %v43, %v46
    %v49 = vmul.f32 %v44, %v46
    %50 = vadd.xlane.f32.xlu0 %v48
    %v51 = vpop.xlane.xlu0 %50
    %52 = vadd.xlane.f32.xlu0 %v49
    %v53 = vpop.xlane.xlu0 %52
    %v56 = vlaneseq
    %v57 = vand.u32 %v56, 127
    %v58 = vperm.slane %v51, %v57
    %v59 = vperm.slane %v53, %v57
    %vm60 = vcmask 1041409
    %v61 = vsel %vm60, %v59, %v58
    %vm63 = vcmask 58368
    %v64 = vsel %vm63, %v61, -inf
    %65 = vmax.xlane.f32.xlu0 %v64
    %v66 = vpop.xlane.xlu0 %65
    %v68 = vperm.slane %v66, 0
    %v69 = vperm.slane %v66, 1
    %v72 = vsub.f32 %v51, %v68
    %v73 = vsub.f32 %v53, %v69
    %v74 = vmul.f32 %v72, 1.442695
    %v75 = vpow.pop %v74
    %v76 = vmul.f32 %v73, 1.442695
    %v77 = vpow.pop %v76
    %80 = vset.pattern.permute.xlu0 0
    %81 = vperm.xlu0 %80, %v75
    %v82 = vpop.permute.xlu0 %81
    %83 = vset.pattern.permute.xlu0 0
    %84 = vperm.xlu0 %83, %v77
    %v85 = vpop.permute.xlu0 %84
    %v86 = vperm.slane %v82, %v57
    %v87 = vperm.slane %v85, %v57
    %v88 = vsel %vm60, %v87, %v86
    %v90 = vsel %vm63, %v88, 0.0
    %91 = vadd.xlane.f32.xlu0 %v90
    %v92 = vpop.xlane.xlu0 %91
    %v93 = vrcp.pop %v92
    %v94 = vmul.f32 %v92, %v93
    %v95 = vsub.f32 2.0, %v94
    %v96 = vmul.f32 %v93, %v95
    %v98 = vperm.slane %v96, 0
    %v99 = vperm.slane %v96, 1
    %v102 = vmul.f32 %v75, %v98
    %v103 = vmul.f32 %v77, %v99
    %105 = vset.pattern.permute.xlu0 0
    %106 = vperm.xlu0 %105, %v102
    %v107 = vpop.permute.xlu0 %106
    %110 = vset.pattern.permute.xlu0 0
    %111 = vperm.xlu0 %110, %v103
    %v112 = vpop.permute.xlu0 %111
    %v114 = vmul.f32 %v107, %v43
    %v115 = vmul.f32 %v112, %v44
    %v116 = vrot.slane %v114, 4
    %v117 = vadd.f32 %v114, %v116
    %v118 = vrot.slane %v117, 2
    %v119 = vadd.f32 %v117, %v118
    %v120 = vrot.slane %v119, 1
    %v121 = vadd.f32 %v119, %v120
    %v122 = vrot.slane %v115, 4
    %v123 = vadd.f32 %v115, %v122
    %v124 = vrot.slane %v123, 2
    %v125 = vadd.f32 %v123, %v124
    %v126 = vrot.slane %v125, 1
    %v127 = vadd.f32 %v125, %v126
    %v130 = vsel %vm60, %v127, %v121
    %132 = vst [vmem:[#allocation7] sm:$0x3] %v130
    // Predicated region
    $region18: #{tpu_custom_call.1} parent=1 // pred_check
      _
    $region19: #{tpu_custom_call.1} parent=1 // pred_check_branch
      %134 = sbr.rel (0) target = $region21
    $region20: #{tpu_custom_call.1} parent=1 // pred_region
      %136 = vsyncadd [#allocation4], 0
      %s138 = sshll.u32 [#allocation7], 4
      %s139 = int_to_ptr.vmem [resolvable:$true] %s138
      %s140 = sshll.u32 %s2, 4
      %s141 = int_to_ptr.hbm [resolvable:$true] %s140
      %143 = dma.vmem_to_hbm [thread:$0]  %s139, 32, %s141, [#allocation4]
    $region21: #{tpu_custom_call.1} parent=1 // pred_fallthru
      _
    // Predicated region
    $region22: #{tpu_custom_call.1} parent=1 // pred_check
      _
    $region23: #{tpu_custom_call.1} parent=1 // pred_check_branch
      %145 = sbr.rel (0) target = $region25
    $region24: #{tpu_custom_call.1} parent=1 // pred_region
      %147 = dma.done [#allocation4], 32
    $region25: #{tpu_custom_call.1} parent=1 // pred_fallthru
      _
    %148 = vsyncpa [#allocation3], 1
    %149 = vsyncpa [#allocation6], 1
    %150 = vsyncpa [#allocation4], 1

</llo_original>
